<compile_context>
chip_gen: v7x
topology: tpu7x:2x2x1
jax: 0.10.0
libtpu: 0.0.40
codegen_flags: <defaults>
</compile_context>

<pallas_src>
import jax
import jax.numpy as jnp
from jax.experimental import pallas as pl
from jax.experimental.pallas import tpu as pltpu


def _round_up(x, m):
    return (x + m - 1) // m * m


def _make_kernel(n_inputs, fused_k):
    n_w = 1 if fused_k else n_inputs

    def kernel(*refs):
        x_refs = refs[:n_inputs]
        wf_refs = refs[n_inputs:n_inputs + n_w]
        (bf_ref, wsq_ref, wex_ref, wattn_ref, battn_ref,
         x1_ref, x2_ref) = refs[n_inputs + n_w:]

        # --- fusion linear: e = concat(x_i) @ Wf + b (f32 accumulation on MXU) ---
        # TODO(synk): fusion_dropout implemented as identity (inference / eval mode).
        if fused_k:
            if n_inputs == 1:
                x = x_refs[0][...]
            else:
                x = jnp.concatenate([r[...] for r in x_refs], axis=-1)
            e = jnp.dot(x, wf_refs[0][...], preferred_element_type=jnp.float32)
        else:
            e = jnp.dot(x_refs[0][...], wf_refs[0][...],
                        preferred_element_type=jnp.float32)
            for x_r, w_r in zip(x_refs[1:], wf_refs[1:]):
                e = e + jnp.dot(x_r[...], w_r[...],
                                preferred_element_type=jnp.float32)
        e = e + bf_ref[...].astype(jnp.float32)

        # --- SENet gates: sigmoid(relu(e @ Wsq) @ Wex); squeeze dim lane-padded ---
        w_dtype = wsq_ref.dtype
        h = jnp.dot(e.astype(w_dtype), wsq_ref[...],
                    preferred_element_type=jnp.float32)
        h = jnp.maximum(h, 0.0)
        g = jax.nn.sigmoid(jnp.dot(h.astype(w_dtype), wex_ref[...],
                                   preferred_element_type=jnp.float32))
        x1_ref[...] = (e * g).astype(x1_ref.dtype)

        # --- SoftAttention: weight pre-broadcast to full lane width, so the MXU
        #     result is already replicated per row -> plain VPU multiply.
        score = jnp.dot(e.astype(wattn_ref.dtype), wattn_ref[...],
                        preferred_element_type=jnp.float32) + battn_ref[0, 0]
        x2_ref[...] = (e * score).astype(x2_ref.dtype)

    return kernel


def concat_dense_se(inputs, params, *, tb=1024, out_dtype=None):
    """Fused ConcatDenseSE forward. `inputs` is a sequence of (B, M_i) arrays."""
    inputs = tuple(inputs)
    n = len(inputs)
    B = int(inputs[0].shape[0])
    widths = tuple(int(x.shape[1]) for x in inputs)
    sum_m = sum(widths)

    w_fusion = params["w_fusion_t"]            # (sum(M_i), H), pre-transposed
    H = int(w_fusion.shape[1])
    w_dtype = w_fusion.dtype
    r = int(params["w_squeeze_t"].shape[1])
    r_pad = _round_up(r, 128)
    if out_dtype is None:
        out_dtype = inputs[0].dtype

    # Zero-pad the squeeze dim to lane width (numerically identical through ReLU).
    w_sq = params["w_squeeze_t"]
    w_ex = params["w_excite_t"]
    if r_pad != r:
        w_sq = jnp.pad(w_sq, ((0, 0), (0, r_pad - r)))
        w_ex = jnp.pad(w_ex, ((0, r_pad - r), (0, 0)))

    # Lane-broadcast the attention column (H,1) -> (H,H); bias stays an SMEM scalar.
    w_attn_b = jnp.broadcast_to(params["w_attn_col"], (H, H))
    b_attn_f32 = params["b_attn"].astype(jnp.float32)

    # Fusion weight: single K = sum(M_i) matmul when modality widths are lane aligned
    # (fills the 256-deep MXU on v6e/v7x); otherwise accumulate per-modality dots.
    fused_k = (n == 1) or all(m % 128 == 0 for m in widths)
    if fused_k:
        wf_ops = [w_fusion]
        wf_specs = [pl.BlockSpec((sum_m, H), lambda i: (0, 0))]
    else:
        wf_ops, off = [], 0
        for m in widths:
            wf_ops.append(w_fusion[off:off + m, :])
            off += m
        wf_specs = [pl.BlockSpec((m, H), lambda i: (0, 0)) for m in widths]

    # Batch tile: multiple of the dtype's sublane packing; no host-side batch padding.
    act_itemsize = jnp.dtype(inputs[0].dtype).itemsize
    sub = 8 * max(1, 4 // act_itemsize)        # f32 -> 8, bf16 -> 16 sublanes
    tb = max(sub, min(_round_up(tb, sub), _round_up(B, sub)))
    grid = (pl.cdiv(B, tb),)                   # edge-block rows are masked on store

    # VMEM budget: resident weights + double-buffered I/O tiles + f32 intermediates.
    # Capped at 48 MiB to leave headroom under v7x's 64 MiB per-TC VMEM.
    w_itemsize = jnp.dtype(w_dtype).itemsize
    out_itemsize = jnp.dtype(out_dtype).itemsize
    w_bytes = (sum_m * H + 2 * H * r_pad + H * H + H) * w_itemsize
    io_bytes = 2 * (tb * sum_m * act_itemsize + 2 * tb * H * out_itemsize)
    inter_bytes = (3 * tb * H + tb * r_pad) * 4
    vmem_limit = int(min(48 << 20,
                         max(16 << 20,
                             2 * (w_bytes + io_bytes + inter_bytes) + (4 << 20))))

    x_specs = [pl.BlockSpec((tb, m), lambda i: (i, 0)) for m in widths]
    const_specs = [
        pl.BlockSpec((1, H), lambda i: (0, 0)),              # b_fusion
        pl.BlockSpec((H, r_pad), lambda i: (0, 0)),          # w_squeeze_t (lane-padded)
        pl.BlockSpec((r_pad, H), lambda i: (0, 0)),          # w_excite_t  (lane-padded)
        pl.BlockSpec((H, H), lambda i: (0, 0)),              # w_attn, lane-broadcast
        pl.BlockSpec(memory_space=pltpu.MemorySpace.SMEM),   # b_attn scalar (f32)
    ]
    out_spec = pl.BlockSpec((tb, H), lambda i: (i, 0))

    x1, x2 = pl.pallas_call(
        _make_kernel(n, fused_k),
        grid=grid,
        in_specs=x_specs + wf_specs + const_specs,
        out_specs=(out_spec, out_spec),
        out_shape=(
            jax.ShapeDtypeStruct((B, H), out_dtype),   # x1: SE-gated embedding
            jax.ShapeDtypeStruct((B, H), out_dtype),   # x2: soft-attention output
        ),
        compiler_params=pltpu.CompilerParams(
            dimension_semantics=("parallel",),
            vmem_limit_bytes=vmem_limit,
        ),
    )(*inputs, *wf_ops,
      params["b_fusion"], w_sq, w_ex, w_attn_b, b_attn_f32)
    return x1, x2


def init_params(key, multimodal_hidden_size, hidden_size, se_ratio, dtype=jnp.float32):
    ks = jax.random.split(key, 5)
    r = hidden_size // se_ratio
    scale = 0.02
    return {
        # fusion: nn.Linear(multimodal_hidden_size, hidden_size), weight pre-transposed to (in, out)
        "w_fusion_t": (scale * jax.random.normal(ks[0], (multimodal_hidden_size, hidden_size))).astype(dtype),
        "b_fusion":   (scale * jax.random.normal(ks[1], (1, hidden_size))).astype(dtype),
        # SENet.sequeeze: nn.Linear(hidden, hidden // ratio, bias=False)
        "w_squeeze_t": (scale * jax.random.normal(ks[2], (hidden_size, r))).astype(dtype),
        # SENet.excitation: nn.Linear(hidden // ratio, hidden, bias=False)
        "w_excite_t":  (scale * jax.random.normal(ks[3], (r, hidden_size))).astype(dtype),
        # SoftAttention.attn: nn.Linear(hidden, 1) — weight stored as a column (hidden, 1)
        "w_attn_col":  (scale * jax.random.normal(ks[4], (hidden_size, 1))).astype(dtype),
        "b_attn":      jnp.full((1, 1), 0.01, dtype=dtype),
    }


def reference(inputs, params):
    x = jnp.concatenate(inputs, axis=1)
    e = x @ params["w_fusion_t"] + params["b_fusion"]
    g = jax.nn.sigmoid(jnp.maximum(e @ params["w_squeeze_t"], 0.0) @ params["w_excite_t"])
    x1 = e * g
    score = e @ params["w_attn_col"] + params["b_attn"][0, 0]
    x2 = e * score
    return x1, x2


if __name__ == "__main__":
    # SMALL lane-aligned shapes consistent with the module: two modality embeddings
    # of width 128 -> multimodal_hidden_size=256, hidden_size=128, se_ratio=8
    # (squeeze dim 16, zero-padded to 128 in the wrapper), dropout (eval -> identity).
    B, M1, M2, H, SE_RATIO = 16, 128, 128, 128, 8
    key = jax.random.PRNGKey(0)
    k1, k2, kp = jax.random.split(key, 3)
    inputs = (
        jax.random.normal(k1, (B, M1), dtype=jnp.float32),
        jax.random.normal(k2, (B, M2), dtype=jnp.float32),
    )
    params = init_params(kp, M1 + M2, H, SE_RATIO)

    # f32 run with tb=8 so the kernel exercises a 2-step batch grid.
    x1, x2 = concat_dense_se(inputs, params, tb=8)
    jax.block_until_ready((x1, x2))

    r1, r2 = reference(inputs, params)
    assert x1.shape == r1.shape and x2.shape == r2.shape
    assert jnp.allclose(x1, r1, atol=1e-4, rtol=1e-4), "x1 mismatch (f32)"
    assert jnp.allclose(x2, r2, atol=1e-4, rtol=1e-4), "x2 mismatch (f32)"

    # bf16 activation/weight path (halves HBM traffic; MXU-native bf16 matmuls).
    inputs_bf = tuple(x.astype(jnp.bfloat16) for x in inputs)
    params_bf = {k: v.astype(jnp.bfloat16) for k, v in params.items()}
    y1, y2 = concat_dense_se(inputs_bf, params_bf)
    jax.block_until_ready((y1, y2))

    rb1, rb2 = reference(tuple(x.astype(jnp.float32) for x in inputs_bf),
                         {k: v.astype(jnp.float32) for k, v in params_bf.items()})
    assert jnp.allclose(y1.astype(jnp.float32), rb1, atol=5e-2, rtol=5e-2), "x1 mismatch (bf16)"
    assert jnp.allclose(y2.astype(jnp.float32), rb2, atol=5e-2, rtol=5e-2), "x2 mismatch (bf16)"

    print("KERNEL_OK")
</pallas_src>

<mosaic_0001>
module attributes {stable_mosaic.version = 11 : i64} {
  func.func @kernel(%arg0: i32, %arg1: memref<8x128xf32, #tpu.memory_space<vmem>>, %arg2: memref<8x128xf32, #tpu.memory_space<vmem>>, %arg3: memref<256x128xf32, #tpu.memory_space<vmem>>, %arg4: memref<1x128xf32, #tpu.memory_space<vmem>>, %arg5: memref<128x128xf32, #tpu.memory_space<vmem>>, %arg6: memref<128x128xf32, #tpu.memory_space<vmem>>, %arg7: memref<128x128xf32, #tpu.memory_space<vmem>>, %arg8: memref<1x1xf32, #tpu.memory_space<smem>>, %arg9: memref<8x128xf32, #tpu.memory_space<vmem>>, %arg10: memref<8x128xf32, #tpu.memory_space<vmem>>) attributes {dimension_semantics = [#tpu.dimension_semantics<parallel>], iteration_bounds = array<i64: 2>, scalar_prefetch = 0 : i64, scratch_operands = 0 : i64, tpu.core_type = #tpu.core_type<tc>, window_params = [{transform_indices = @transform_0, window_bounds = array<i64: 8, 128>}, {transform_indices = @transform_1, window_bounds = array<i64: 8, 128>}, {pipeline_mode = #tpu.pipeline_mode<synchronous>, transform_indices = @transform_2, window_bounds = array<i64: 256, 128>}, {pipeline_mode = #tpu.pipeline_mode<synchronous>, transform_indices = @transform_3, window_bounds = array<i64: 1, 128>}, {pipeline_mode = #tpu.pipeline_mode<synchronous>, transform_indices = @transform_4, window_bounds = array<i64: 128, 128>}, {pipeline_mode = #tpu.pipeline_mode<synchronous>, transform_indices = @transform_5, window_bounds = array<i64: 128, 128>}, {pipeline_mode = #tpu.pipeline_mode<synchronous>, transform_indices = @transform_6, window_bounds = array<i64: 128, 128>}, {transform_indices = @transform_7, window_bounds = array<i64: 1, 1>}, {transform_indices = @transform_8, window_bounds = array<i64: 8, 128>}, {transform_indices = @transform_9, window_bounds = array<i64: 8, 128>}]} {
    %c0 = arith.constant 0 : index
    %c0_0 = arith.constant 0 : index
    %0 = vector.load %arg1[%c0, %c0_0] : memref<8x128xf32, #tpu.memory_space<vmem>>, vector<8x128xf32>
    %c0_1 = arith.constant 0 : index
    %c0_2 = arith.constant 0 : index
    %1 = vector.load %arg2[%c0_1, %c0_2] : memref<8x128xf32, #tpu.memory_space<vmem>>, vector<8x128xf32>
    %2 = tpu.concatenate %0, %1 in 1 : vector<8x128xf32>, vector<8x128xf32> -> vector<8x256xf32>
    %c0_3 = arith.constant 0 : index
    %c0_4 = arith.constant 0 : index
    %3 = vector.load %arg3[%c0_3, %c0_4] : memref<256x128xf32, #tpu.memory_space<vmem>>, vector<256x128xf32>
    %cst = arith.constant dense<0.000000e+00> : vector<8x128xf32>
    %4 = tpu.matmul %2, %3, %cst {dimension_numbers = #tpu.dot_dimension_numbers<[1], [0], [0], [1], [0, 0, 1, 1], [], []>} : vector<8x256xf32>, vector<256x128xf32>, vector<8x128xf32> -> vector<8x128xf32>
    %c0_5 = arith.constant 0 : index
    %c0_6 = arith.constant 0 : index
    %5 = vector.load %arg4[%c0_5, %c0_6] : memref<1x128xf32, #tpu.memory_space<vmem>>, vector<1x128xf32>
    %6 = vector.broadcast %5 : vector<1x128xf32> to vector<8x128xf32>
    %7 = arith.addf %4, %6 : vector<8x128xf32>
    %c0_7 = arith.constant 0 : index
    %c0_8 = arith.constant 0 : index
    %8 = vector.load %arg5[%c0_7, %c0_8] : memref<128x128xf32, #tpu.memory_space<vmem>>, vector<128x128xf32>
    %cst_9 = arith.constant dense<0.000000e+00> : vector<8x128xf32>
    %9 = tpu.matmul %7, %8, %cst_9 {dimension_numbers = #tpu.dot_dimension_numbers<[1], [0], [0], [1], [0, 0, 1, 1], [], []>} : vector<8x128xf32>, vector<128x128xf32>, vector<8x128xf32> -> vector<8x128xf32>
    %cst_10 = arith.constant 0.000000e+00 : f32
    %10 = vector.broadcast %cst_10 : f32 to vector<8x128xf32>
    %11 = arith.maximumf %9, %10 : vector<8x128xf32>
    %c0_11 = arith.constant 0 : index
    %c0_12 = arith.constant 0 : index
    %12 = vector.load %arg6[%c0_11, %c0_12] : memref<128x128xf32, #tpu.memory_space<vmem>>, vector<128x128xf32>
    %cst_13 = arith.constant dense<0.000000e+00> : vector<8x128xf32>
    %13 = tpu.matmul %11, %12, %cst_13 {dimension_numbers = #tpu.dot_dimension_numbers<[1], [0], [0], [1], [0, 0, 1, 1], [], []>} : vector<8x128xf32>, vector<128x128xf32>, vector<8x128xf32> -> vector<8x128xf32>
    %14 = arith.negf %13 : vector<8x128xf32>
    %15 = math.exp %14 : vector<8x128xf32>
    %cst_14 = arith.constant 1.000000e+00 : f32
    %16 = vector.broadcast %cst_14 : f32 to vector<8x128xf32>
    %17 = arith.addf %16, %15 : vector<8x128xf32>
    %18 = arith.divf %16, %17 : vector<8x128xf32>
    %19 = arith.mulf %7, %18 : vector<8x128xf32>
    %c0_15 = arith.constant 0 : index
    %c0_16 = arith.constant 0 : index
    %20 = vector.load %arg9[%c0_15, %c0_16] : memref<8x128xf32, #tpu.memory_space<vmem>>, vector<8x128xf32>
    tpu.vector_store %arg9[%c0_15, %c0_16], %19 {strides = array<i32>} : memref<8x128xf32, #tpu.memory_space<vmem>>, vector<8x128xf32>,
    %c0_17 = arith.constant 0 : index
    %c0_18 = arith.constant 0 : index
    %21 = vector.load %arg7[%c0_17, %c0_18] : memref<128x128xf32, #tpu.memory_space<vmem>>, vector<128x128xf32>
    %cst_19 = arith.constant dense<0.000000e+00> : vector<8x128xf32>
    %22 = tpu.matmul %7, %21, %cst_19 {dimension_numbers = #tpu.dot_dimension_numbers<[1], [0], [0], [1], [0, 0, 1, 1], [], []>} : vector<8x128xf32>, vector<128x128xf32>, vector<8x128xf32> -> vector<8x128xf32>
    %c0_20 = arith.constant 0 : index
    %c0_21 = arith.constant 0 : index
    %23 = memref.load %arg8[%c0_20, %c0_21] : memref<1x1xf32, #tpu.memory_space<smem>>
    %24 = vector.broadcast %23 : f32 to vector<8x128xf32>
    %25 = arith.addf %22, %24 : vector<8x128xf32>
    %26 = arith.mulf %7, %25 : vector<8x128xf32>
    %c0_22 = arith.constant 0 : index
    %c0_23 = arith.constant 0 : index
    %27 = vector.load %arg10[%c0_22, %c0_23] : memref<8x128xf32, #tpu.memory_space<vmem>>, vector<8x128xf32>
    tpu.vector_store %arg10[%c0_22, %c0_23], %26 {strides = array<i32>} : memref<8x128xf32, #tpu.memory_space<vmem>>, vector<8x128xf32>,
    return
  }
  func.func @transform_0(%arg0: i32) -> (i32, i32) {
    %c0_i32 = arith.constant 0 : i32
    %c0_i32_0 = arith.constant 0 : i32
    return %arg0, %c0_i32 : i32, i32
  }
  func.func @transform_1(%arg0: i32) -> (i32, i32) {
    %c0_i32 = arith.constant 0 : i32
    %c0_i32_0 = arith.constant 0 : i32
    return %arg0, %c0_i32 : i32, i32
  }
  func.func @transform_2(%arg0: i32) -> (i32, i32) {
    %c0_i32 = arith.constant 0 : i32
    %c0_i32_0 = arith.constant 0 : i32
    %c0_i32_1 = arith.constant 0 : i32
    return %c0_i32, %c0_i32_0 : i32, i32
  }
  func.func @transform_3(%arg0: i32) -> (i32, i32) {
    %c0_i32 = arith.constant 0 : i32
    %c0_i32_0 = arith.constant 0 : i32
    %c0_i32_1 = arith.constant 0 : i32
    return %c0_i32, %c0_i32_0 : i32, i32
  }
  func.func @transform_4(%arg0: i32) -> (i32, i32) {
    %c0_i32 = arith.constant 0 : i32
    %c0_i32_0 = arith.constant 0 : i32
    %c0_i32_1 = arith.constant 0 : i32
    return %c0_i32, %c0_i32_0 : i32, i32
  }
  func.func @transform_5(%arg0: i32) -> (i32, i32) {
    %c0_i32 = arith.constant 0 : i32
    %c0_i32_0 = arith.constant 0 : i32
    %c0_i32_1 = arith.constant 0 : i32
    return %c0_i32, %c0_i32_0 : i32, i32
  }
  func.func @transform_6(%arg0: i32) -> (i32, i32) {
    %c0_i32 = arith.constant 0 : i32
    %c0_i32_0 = arith.constant 0 : i32
    %c0_i32_1 = arith.constant 0 : i32
    return %c0_i32, %c0_i32_0 : i32, i32
  }
  func.func @transform_7(%arg0: i32) -> (i32, i32) {
    %c0_i32 = arith.constant 0 : i32
    %c0_i32_0 = arith.constant 0 : i32
    %c0_i32_1 = arith.constant 0 : i32
    return %c0_i32, %c0_i32_0 : i32, i32
  }
  func.func @transform_8(%arg0: i32) -> (i32, i32) {
    %c0_i32 = arith.constant 0 : i32
    %c0_i32_0 = arith.constant 0 : i32
    return %arg0, %c0_i32 : i32, i32
  }
  func.func @transform_9(%arg0: i32) -> (i32, i32) {
    %c0_i32 = arith.constant 0 : i32
    %c0_i32_0 = arith.constant 0 : i32
    return %arg0, %c0_i32 : i32, i32
  }
}

</mosaic_0001>

<llo_original>
// kernel: tpu_custom_call.1
$region0: #{tpu_custom_call.1}
  #allocation0 [shape = 'u32[]', space=smem, size = 0x4, offset = 0x4, fixed_abs, tag = 'smem constant byte address 0x4 - core index']
  #allocation1 [shape = 'u32[144,128]{1,0:T(1,128)}', space=vmem, size = 0x12000, scoped, tag = 'internal scratch']
  #allocation2 [shape = 'f32[1,1]{1,0:T(1,128)S(6)}', space=smem, size = 0x200, scoped, tag = 'scoped memory for tpu_custom_call.1']
  %s0 = inlined_call_operand.hbm [shape: f32[16,128], index: 0, kind: input, shape index: {}]
  %s1 = inlined_call_operand.hbm [shape: f32[16,128], index: 1, kind: input, shape index: {}]
  %s2 = inlined_call_operand.hbm [shape: f32[256,128], index: 2, kind: input, shape index: {}]
  %s3 = inlined_call_operand.vmem [shape: f32[1,128], index: 3, kind: input, shape index: {}]
  %s4 = inlined_call_operand.hbm [shape: f32[128,128], index: 4, kind: input, shape index: {}]
  %s5 = inlined_call_operand.hbm [shape: f32[128,128], index: 5, kind: input, shape index: {}]
  %s6 = inlined_call_operand.hbm [shape: f32[128,128], index: 6, kind: input, shape index: {}]
  %s7 = inlined_call_operand.<no memory space> [shape: f32[1,1], index: 7, kind: input, shape index: {}]
  %s8 = inlined_call_operand.hbm [shape: f32[16,128], index: 8, kind: output, shape index: {0}]
  %s9 = inlined_call_operand.hbm [shape: f32[16,128], index: 9, kind: output, shape index: {1}]
  %10 = xla_tuple %s8, %s9
  %s11 = sld [smem:[#allocation0]]
  $region97: #{tpu_custom_call.1} parent=0
    _
  %s13 = ssub.s32 1, %s11
  %s14 = scalar_select 0, %s13, %s11
  %15 = sst [smem:[#allocation2]] %s7
  $region1: #{tpu_custom_call.1} parent=0
    #allocation3 [shape = 'u8[8192]{0}', space=vmem, size = 0x2000, scoped, tag = 'input window, operand 0']
    #allocation4 [shape = 's32[2]{0}', space=sflag, size = 0x8, scoped, tag = 'scoped memory for tpu_custom_call.1']
    #allocation5 [shape = 's32[2]{0}', space=sflag, size = 0x8, scoped, tag = 'scoped memory for tpu_custom_call.1']
    #allocation6 [shape = 'u8[8192]{0}', space=vmem, size = 0x2000, scoped, tag = 'input window, operand 1']
    #allocation7 [shape = 's32[2]{0}', space=sflag, size = 0x8, scoped, tag = 'scoped memory for tpu_custom_call.1']
    #allocation8 [shape = 'u8[131072]{0}', space=vmem, size = 0x20000, scoped, tag = 'input window, operand 2, single buffered']
    #allocation9 [shape = 'u8[65536]{0}', space=vmem, size = 0x10000, scoped, tag = 'input window, operand 4, single buffered']
    #allocation10 [shape = 's32[1]{0}', space=sflag, size = 0x4, scoped, tag = 'scoped memory for tpu_custom_call.1']
    #allocation11 [shape = 'u8[65536]{0}', space=vmem, size = 0x10000, scoped, tag = 'input window, operand 5, single buffered']
    #allocation12 [shape = 'u8[65536]{0}', space=vmem, size = 0x10000, scoped, tag = 'input window, operand 6, single buffered']
    #allocation13 [shape = 's32[1]{0}', space=sflag, size = 0x4, scoped, tag = 'scoped memory for tpu_custom_call.1']
    #allocation14 [shape = 'u8[8192]{0}', space=vmem, size = 0x2000, scoped, tag = 'output window, operand 0']
    #allocation15 [shape = 'u8[8192]{0}', space=vmem, size = 0x2000, scoped, tag = 'output window, operand 1']
    #allocation16 [shape = 's32[2]{0}', space=sflag, size = 0x8, scoped, tag = 'scoped memory for tpu_custom_call.1']
    %16 = vsyncpa [#allocation4], 0
    %s17 = scalar_lea.sflag [#allocation4], 1
    %18 = vsyncpa %s17, 0
    %19 = vsyncpa [#allocation7], 0
    %s20 = scalar_lea.sflag [#allocation7], 1
    %21 = vsyncpa %s20, 0
    %22 = vsyncpa [#allocation10], 0
    %23 = vsyncpa [#allocation13], 0
    %24 = vsyncpa [#allocation5], 0
    %s25 = scalar_lea.sflag [#allocation5], 1
    %26 = vsyncpa %s25, 0
    %27 = vsyncpa [#allocation16], 0
    %s28 = scalar_lea.sflag [#allocation16], 1
    %29 = vsyncpa %s28, 0
    loop: start=0, step=1, limit=4
    $region2: #{tpu_custom_call.1} parent=1 // loop_pre_header
      _
    $region3: #{tpu_custom_call.1} parent=1 // loop_header
      %s31 = sphi 0, %s35
      %p32 = scmp.ge.s32.totalorder %s31, 4
      %s41 = sphi 0, %s43
      %s44 = sphi 0, %s41
      %s45 = sphi 0, %s44
      %s61 = sphi 0, %s45
      %s67 = sphi 0, %s69
      %s70 = sphi 0, %s67
      %s71 = sphi 0, %s70
      %s87 = sphi 0, %s71
      %s91 = sphi 0, %s91
      %s93 = sphi 0, %s91
      %s94 = sphi 0, %s93
      %s108 = sphi 0, %s94
      %s112 = sphi 0, %s112
      %s114 = sphi 0, %s112
      %s115 = sphi 0, %s114
      %s129 = sphi 0, %s115
      %s133 = sphi 0, %s133
      %s135 = sphi 0, %s133
      %s136 = sphi 0, %s135
      %s150 = sphi 0, %s136
      %s154 = sphi 0, %s154
      %s156 = sphi 0, %s154
      %s157 = sphi 0, %s156
      %s171 = sphi 0, %s157
      %s175 = sphi 0, %s175
      %s177 = sphi 0, %s175
      %s178 = sphi 0, %s177
      %s192 = sphi 0, %s178
      %s196 = sphi 0, %s196
      %s198 = sphi 0, %s196
      %s199 = sphi 0, %s198
      %s213 = sphi 0, %s199
      %s219 = sphi 0, %s221
      %s222 = sphi 0, %s219
      %s223 = sphi 0, %s222
      %s239 = sphi 0, %s223
      %s245 = sphi 0, %s247
      %s248 = sphi 0, %s245
      %s249 = sphi 0, %s248
      %s265 = sphi 0, %s249
    $region4: #{tpu_custom_call.1} parent=1 // loop_header_branch
      %34 = sbr.rel (%p32) target = $region8
    $region5: #{tpu_custom_call.1} parent=1 // loop_body
      %s36 = ssub.s32 %s31, 1
      %s37 = ssub.s32 %s31, 2
      %s38 = sadd.s32 %s31, 1
      %s39 = ssub.s32 %s31, %s38
      %p40 = scmp.eq.s32.totalorder %s39, 0
      %s42 = sadd.s32 %s41, 1
      %s43 = scalar_select %p40, %s41, %s42
      %p46 = pneg %p40
      %p47 = scmp.eq.s32.totalorder %s31, 1
      %p48 = por %p46, %p47
      %p49 = scmp.ne.s32.totalorder %s41, %s44
      %p50 = scmp.eq.s32.totalorder %s31, 0
      %p51 = por %p49, %p50
      %p52 = scmp.ne.s32.totalorder %s41, %s44
      %p53 = scmp.eq.s32.totalorder %s36, 1
      %p54 = por %p52, %p53
      %p55 = scmp.ne.s32.totalorder %s44, %s45
      %p56 = scmp.eq.s32.totalorder %s36, 0
      %p57 = por %p55, %p56
      %p58 = scmp.ne.s32.totalorder %s44, %s45
      %p59 = scmp.eq.s32.totalorder %s37, 1
      %p60 = por %p58, %p59
      %p62 = scmp.ne.s32.totalorder %s45, %s61
      %p63 = scmp.eq.s32.totalorder %s37, 0
      %p64 = por %p62, %p63
      %s65 = ssub.s32 %s31, %s38
      %p66 = scmp.eq.s32.totalorder %s65, 0
      %s68 = sadd.s32 %s67, 1
      %s69 = scalar_select %p66, %s67, %s68
      %p72 = pneg %p66
      %p73 = scmp.eq.s32.totalorder %s31, 1
      %p74 = por %p72, %p73
      %p75 = scmp.ne.s32.totalorder %s67, %s70
      %p76 = scmp.eq.s32.totalorder %s31, 0
      %p77 = por %p75, %p76
      %p78 = scmp.ne.s32.totalorder %s67, %s70
      %p79 = scmp.eq.s32.totalorder %s36, 1
      %p80 = por %p78, %p79
      %p81 = scmp.ne.s32.totalorder %s70, %s71
      %p82 = scmp.eq.s32.totalorder %s36, 0
      %p83 = por %p81, %p82
      %p84 = scmp.ne.s32.totalorder %s70, %s71
      %p85 = scmp.eq.s32.totalorder %s37, 1
      %p86 = por %p84, %p85
      %p88 = scmp.ne.s32.totalorder %s71, %s87
      %p89 = scmp.eq.s32.totalorder %s37, 0
      %p90 = por %p88, %p89
      %s92 = sadd.s32 %s91, 1
      %p95 = scmp.eq.s32.totalorder %s31, 1
      %p96 = scmp.ne.s32.totalorder %s91, %s93
      %p97 = scmp.eq.s32.totalorder %s31, 0
      %p98 = por %p96, %p97
      %p99 = scmp.ne.s32.totalorder %s91, %s93
      %p100 = scmp.eq.s32.totalorder %s36, 1
      %p101 = por %p99, %p100
      %p102 = scmp.ne.s32.totalorder %s93, %s94
      %p103 = scmp.eq.s32.totalorder %s36, 0
      %p104 = por %p102, %p103
      %p105 = scmp.ne.s32.totalorder %s93, %s94
      %p106 = scmp.eq.s32.totalorder %s37, 1
      %p107 = por %p105, %p106
      %p109 = scmp.ne.s32.totalorder %s94, %s108
      %p110 = scmp.eq.s32.totalorder %s37, 0
      %p111 = por %p109, %p110
      %s113 = sadd.s32 %s112, 1
      %p116 = scmp.eq.s32.totalorder %s31, 1
      %p117 = scmp.ne.s32.totalorder %s112, %s114
      %p118 = scmp.eq.s32.totalorder %s31, 0
      %p119 = por %p117, %p118
      %p120 = scmp.ne.s32.totalorder %s112, %s114
      %p121 = scmp.eq.s32.totalorder %s36, 1
      %p122 = por %p120, %p121
      %p123 = scmp.ne.s32.totalorder %s114, %s115
      %p124 = scmp.eq.s32.totalorder %s36, 0
      %p125 = por %p123, %p124
      %p126 = scmp.ne.s32.totalorder %s114, %s115
      %p127 = scmp.eq.s32.totalorder %s37, 1
      %p128 = por %p126, %p127
      %p130 = scmp.ne.s32.totalorder %s115, %s129
      %p131 = scmp.eq.s32.totalorder %s37, 0
      %p132 = por %p130, %p131
      %s134 = sadd.s32 %s133, 1
      %p137 = scmp.eq.s32.totalorder %s31, 1
      %p138 = scmp.ne.s32.totalorder %s133, %s135
      %p139 = scmp.eq.s32.totalorder %s31, 0
      %p140 = por %p138, %p139
      %p141 = scmp.ne.s32.totalorder %s133, %s135
      %p142 = scmp.eq.s32.totalorder %s36, 1
      %p143 = por %p141, %p142
      %p144 = scmp.ne.s32.totalorder %s135, %s136
      %p145 = scmp.eq.s32.totalorder %s36, 0
      %p146 = por %p144, %p145
      %p147 = scmp.ne.s32.totalorder %s135, %s136
      %p148 = scmp.eq.s32.totalorder %s37, 1
      %p149 = por %p147, %p148
      %p151 = scmp.ne.s32.totalorder %s136, %s150
      %p152 = scmp.eq.s32.totalorder %s37, 0
      %p153 = por %p151, %p152
      %s155 = sadd.s32 %s154, 1
      %p158 = scmp.eq.s32.totalorder %s31, 1
      %p159 = scmp.ne.s32.totalorder %s154, %s156
      %p160 = scmp.eq.s32.totalorder %s31, 0
      %p161 = por %p159, %p160
      %p162 = scmp.ne.s32.totalorder %s154, %s156
      %p163 = scmp.eq.s32.totalorder %s36, 1
      %p164 = por %p162, %p163
      %p165 = scmp.ne.s32.totalorder %s156, %s157
      %p166 = scmp.eq.s32.totalorder %s36, 0
      %p167 = por %p165, %p166
      %p168 = scmp.ne.s32.totalorder %s156, %s157
      %p169 = scmp.eq.s32.totalorder %s37, 1
      %p170 = por %p168, %p169
      %p172 = scmp.ne.s32.totalorder %s157, %s171
      %p173 = scmp.eq.s32.totalorder %s37, 0
      %p174 = por %p172, %p173
      %s176 = sadd.s32 %s175, 1
      %p179 = scmp.eq.s32.totalorder %s31, 1
      %p180 = scmp.ne.s32.totalorder %s175, %s177
      %p181 = scmp.eq.s32.totalorder %s31, 0
      %p182 = por %p180, %p181
      %p183 = scmp.ne.s32.totalorder %s175, %s177
      %p184 = scmp.eq.s32.totalorder %s36, 1
      %p185 = por %p183, %p184
      %p186 = scmp.ne.s32.totalorder %s177, %s178
      %p187 = scmp.eq.s32.totalorder %s36, 0
      %p188 = por %p186, %p187
      %p189 = scmp.ne.s32.totalorder %s177, %s178
      %p190 = scmp.eq.s32.totalorder %s37, 1
      %p191 = por %p189, %p190
      %p193 = scmp.ne.s32.totalorder %s178, %s192
      %p194 = scmp.eq.s32.totalorder %s37, 0
      %p195 = por %p193, %p194
      %s197 = sadd.s32 %s196, 1
      %p200 = scmp.eq.s32.totalorder %s31, 1
      %p201 = scmp.ne.s32.totalorder %s196, %s198
      %p202 = scmp.eq.s32.totalorder %s31, 0
      %p203 = por %p201, %p202
      %p204 = scmp.ne.s32.totalorder %s196, %s198
      %p205 = scmp.eq.s32.totalorder %s36, 1
      %p206 = por %p204, %p205
      %p207 = scmp.ne.s32.totalorder %s198, %s199
      %p208 = scmp.eq.s32.totalorder %s36, 0
      %p209 = por %p207, %p208
      %p210 = scmp.ne.s32.totalorder %s198, %s199
      %p211 = scmp.eq.s32.totalorder %s37, 1
      %p212 = por %p210, %p211
      %p214 = scmp.ne.s32.totalorder %s199, %s213
      %p215 = scmp.eq.s32.totalorder %s37, 0
      %p216 = por %p214, %p215
      %s217 = ssub.s32 %s31, %s38
      %p218 = scmp.eq.s32.totalorder %s217, 0
      %s220 = sadd.s32 %s219, 1
      %s221 = scalar_select %p218, %s219, %s220
      %p224 = pneg %p218
      %p225 = scmp.eq.s32.totalorder %s31, 1
      %p226 = por %p224, %p225
      %p227 = scmp.ne.s32.totalorder %s219, %s222
      %p228 = scmp.eq.s32.totalorder %s31, 0
      %p229 = por %p227, %p228
      %p230 = scmp.ne.s32.totalorder %s219, %s222
      %p231 = scmp.eq.s32.totalorder %s36, 1
      %p232 = por %p230, %p231
      %p233 = scmp.ne.s32.totalorder %s222, %s223
      %p234 = scmp.eq.s32.totalorder %s36, 0
      %p235 = por %p233, %p234
      %p236 = scmp.ne.s32.totalorder %s222, %s223
      %p237 = scmp.eq.s32.totalorder %s37, 1
      %p238 = por %p236, %p237
      %p240 = scmp.ne.s32.totalorder %s223, %s239
      %p241 = scmp.eq.s32.totalorder %s37, 0
      %p242 = por %p240, %p241
      %s243 = ssub.s32 %s31, %s38
      %p244 = scmp.eq.s32.totalorder %s243, 0
      %s246 = sadd.s32 %s245, 1
      %s247 = scalar_select %p244, %s245, %s246
      %p250 = pneg %p244
      %p251 = scmp.eq.s32.totalorder %s31, 1
      %p252 = por %p250, %p251
      %p253 = scmp.ne.s32.totalorder %s245, %s248
      %p254 = scmp.eq.s32.totalorder %s31, 0
      %p255 = por %p253, %p254
      %p256 = scmp.ne.s32.totalorder %s245, %s248
      %p257 = scmp.eq.s32.totalorder %s36, 1
      %p258 = por %p256, %p257
      %p259 = scmp.ne.s32.totalorder %s248, %s249
      %p260 = scmp.eq.s32.totalorder %s36, 0
      %p261 = por %p259, %p260
      %p262 = scmp.ne.s32.totalorder %s248, %s249
      %p263 = scmp.eq.s32.totalorder %s37, 1
      %p264 = por %p262, %p263
      %p266 = scmp.ne.s32.totalorder %s249, %s265
      %p267 = scmp.eq.s32.totalorder %s37, 0
      %p268 = por %p266, %p267
      %p269 = scmp.le.s32.totalorder 1, %s31
      %p270 = scmp.lt.s32.totalorder %s31, 3
      %p271 = pnand %p269, %p270
      %p272 = pneg %p271
      // Predicated region
      $region9: #{tpu_custom_call.1} parent=5 // pred_check
        _
      $region10: #{tpu_custom_call.1} parent=5 // pred_check_branch
        %274 = sbr.rel (%p271) target = $region12
      $region11: #{tpu_custom_call.1} parent=5 // pred_region
        %s275 = ssub.s32 %s31, 1
        // Predicated region
        $region13: #{tpu_custom_call.1} parent=11 // pred_check
          %p276 = pneg %p104
        $region14: #{tpu_custom_call.1} parent=11 // pred_check_branch
          %278 = sbr.rel (%p276) target = $region16
        $region15: #{tpu_custom_call.1} parent=11 // pred_region
          %s280 = ssub.s32 4096, 4096
          %281 = vsyncadd [#allocation7], %s280
          %s282 = sshll.u32 [#allocation8], 4
          %s283 = int_to_ptr.vmem [resolvable:$true] %s282
          %288 = dma.hbm_to_vmem [thread:$0]  %s2, 4096, %s283, [#allocation7], 128, 128, 8
        $region16: #{tpu_custom_call.1} parent=11 // pred_fallthru
          _
        // Predicated region
        $region17: #{tpu_custom_call.1} parent=11 // pred_check
          %p289 = pneg %p125
        $region18: #{tpu_custom_call.1} parent=11 // pred_check_branch
          %291 = sbr.rel (%p289) target = $region20
        $region19: #{tpu_custom_call.1} parent=11 // pred_region
          _
        $region20: #{tpu_custom_call.1} parent=11 // pred_fallthru
          _
        // Predicated region
        $region21: #{tpu_custom_call.1} parent=11 // pred_check
          %p292 = pneg %p146
        $region22: #{tpu_custom_call.1} parent=11 // pred_check_branch
          %294 = sbr.rel (%p292) target = $region24
        $region23: #{tpu_custom_call.1} parent=11 // pred_region
          %s296 = ssub.s32 2048, 2048
          %297 = vsyncadd [#allocation10], %s296
          %s298 = sshll.u32 [#allocation9], 4
          %s299 = int_to_ptr.vmem [resolvable:$true] %s298
          %304 = dma.hbm_to_vmem [thread:$0]  %s4, 2048, %s299, [#allocation10], 128, 128, 8
        $region24: #{tpu_custom_call.1} parent=11 // pred_fallthru
          _
        // Predicated region
        $region25: #{tpu_custom_call.1} parent=11 // pred_check
          %p305 = pneg %p167
        $region26: #{tpu_custom_call.1} parent=11 // pred_check_branch
          %307 = sbr.rel (%p305) target = $region28
        $region27: #{tpu_custom_call.1} parent=11 // pred_region
          %s309 = ssub.s32 2048, 2048
          %310 = vsyncadd [#allocation10], %s309
          %s311 = sshll.u32 [#allocation11], 4
          %s312 = int_to_ptr.vmem [resolvable:$true] %s311
          %317 = dma.hbm_to_vmem [thread:$0]  %s5, 2048, %s312, [#allocation10], 128, 128, 8
        $region28: #{tpu_custom_call.1} parent=11 // pred_fallthru
          _
        // Predicated region
        $region29: #{tpu_custom_call.1} parent=11 // pred_check
          %p318 = pneg %p188
        $region30: #{tpu_custom_call.1} parent=11 // pred_check_branch
          %320 = sbr.rel (%p318) target = $region32
        $region31: #{tpu_custom_call.1} parent=11 // pred_region
          %s322 = ssub.s32 2048, 2048
          %323 = vsyncadd [#allocation13], %s322
          %s324 = sshll.u32 [#allocation12], 4
          %s325 = int_to_ptr.vmem [resolvable:$true] %s324
          %330 = dma.hbm_to_vmem [thread:$0]  %s6, 2048, %s325, [#allocation13], 128, 128, 8
        $region32: #{tpu_custom_call.1} parent=11 // pred_fallthru
          _
        // Predicated region
        $region33: #{tpu_custom_call.1} parent=11 // pred_check
          %p331 = pneg %p209
        $region34: #{tpu_custom_call.1} parent=11 // pred_check_branch
          %333 = sbr.rel (%p331) target = $region36
        $region35: #{tpu_custom_call.1} parent=11 // pred_region
          _
        $region36: #{tpu_custom_call.1} parent=11 // pred_fallthru
          _
      $region12: #{tpu_custom_call.1} parent=5 // pred_fallthru
        _
      %p334 = scmp.lt.s32.totalorder %s31, 2
      // Predicated region
      $region37: #{tpu_custom_call.1} parent=5 // pred_check
        %p335 = pneg %p334
      $region38: #{tpu_custom_call.1} parent=5 // pred_check_branch
        %337 = sbr.rel (%p335) target = $region40
      $region39: #{tpu_custom_call.1} parent=5 // pred_region
        // Predicated region
        $region41: #{tpu_custom_call.1} parent=39 // pred_check
          %p338 = pneg %p51
        $region42: #{tpu_custom_call.1} parent=39 // pred_check_branch
          %340 = sbr.rel (%p338) target = $region44
        $region43: #{tpu_custom_call.1} parent=39 // pred_region
          %s341 = sand.u32 %s41, 1
          %s342 = scalar_lea.sflag [#allocation4], %s341
          %s343 = sand.u32 %s41, 1
          %s344 = smul.addr %s343, 8
          %s345 = scalar_lea.vmem [#allocation3], %s344
          %s347 = ssub.s32 128, 128
          %348 = vsyncadd %s342, %s347
          %s349 = smul.addr %s31, 128
          %s350 = scalar_lea.hbm %s0, %s349
          %s352 = sshll.u32 %s345, 4
          %s353 = int_to_ptr.vmem [resolvable:$true] %s352
          %355 = dma.hbm_to_vmem [thread:$0]  %s350, 128, %s353, %s342
        $region44: #{tpu_custom_call.1} parent=39 // pred_fallthru
          _
        // Predicated region
        $region45: #{tpu_custom_call.1} parent=39 // pred_check
          %p356 = pneg %p77
        $region46: #{tpu_custom_call.1} parent=39 // pred_check_branch
          %358 = sbr.rel (%p356) target = $region48
        $region47: #{tpu_custom_call.1} parent=39 // pred_region
          %s359 = sand.u32 %s31, 1
          %s360 = scalar_lea.sflag [#allocation7], %s359
          %s361 = sand.u32 %s67, 1
          %s362 = smul.addr %s361, 8
          %s363 = scalar_lea.vmem [#allocation6], %s362
          %s365 = ssub.s32 128, 128
          %366 = vsyncadd %s360, %s365
          %s367 = smul.addr %s31, 128
          %s368 = scalar_lea.hbm %s1, %s367
          %s370 = sshll.u32 %s363, 4
          %s371 = int_to_ptr.vmem [resolvable:$true] %s370
          %373 = dma.hbm_to_vmem [thread:$0]  %s368, 128, %s371, %s360
        $region48: #{tpu_custom_call.1} parent=39 // pred_fallthru
          _
      $region40: #{tpu_custom_call.1} parent=5 // pred_fallthru
        _
      %p374 = scmp.le.s32.totalorder 1, %s31
      %p375 = scmp.lt.s32.totalorder %s31, 3
      %p376 = pnand %p374, %p375
      %p377 = pneg %p376
      // Predicated region
      $region49: #{tpu_custom_call.1} parent=5 // pred_check
        _
      $region50: #{tpu_custom_call.1} parent=5 // pred_check_branch
        %379 = sbr.rel (%p376) target = $region52
      $region51: #{tpu_custom_call.1} parent=5 // pred_region
        %s380 = ssub.s32 %s31, 1
        %s381 = sand.u32 %s44, 1
        %s382 = scalar_lea.sflag [#allocation4], %s381
        %s383 = sand.u32 %s44, 1
        %s384 = smul.addr %s383, 8
        %s385 = scalar_lea.vmem [#allocation3], %s384
        // Predicated region
        $region53: #{tpu_custom_call.1} parent=51 // pred_check
          %p386 = pneg %p57
        $region54: #{tpu_custom_call.1} parent=51 // pred_check_branch
          %388 = sbr.rel (%p386) target = $region56
        $region55: #{tpu_custom_call.1} parent=51 // pred_region
          %389 = dma.done %s382, 128
        $region56: #{tpu_custom_call.1} parent=51 // pred_fallthru
          _
        %s390 = sand.u32 %s36, 1
        %s391 = scalar_lea.sflag [#allocation7], %s390
        %s392 = sand.u32 %s70, 1
        %s393 = smul.addr %s392, 8
        %s394 = scalar_lea.vmem [#allocation6], %s393
        // Predicated region
        $region57: #{tpu_custom_call.1} parent=51 // pred_check
          %p395 = pneg %p83
        $region58: #{tpu_custom_call.1} parent=51 // pred_check_branch
          %397 = sbr.rel (%p395) target = $region60
        $region59: #{tpu_custom_call.1} parent=51 // pred_region
          %398 = dma.done %s391, 128
        $region60: #{tpu_custom_call.1} parent=51 // pred_fallthru
          _
        // Predicated region
        $region61: #{tpu_custom_call.1} parent=51 // pred_check
          %p399 = pneg %p104
        $region62: #{tpu_custom_call.1} parent=51 // pred_check_branch
          %401 = sbr.rel (%p399) target = $region64
        $region63: #{tpu_custom_call.1} parent=51 // pred_region
          %402 = dma.done [#allocation7], 4096
        $region64: #{tpu_custom_call.1} parent=51 // pred_fallthru
          _
        // Predicated region
        $region65: #{tpu_custom_call.1} parent=51 // pred_check
          %p403 = pneg %p146
        $region66: #{tpu_custom_call.1} parent=51 // pred_check_branch
          %405 = sbr.rel (%p403) target = $region68
        $region67: #{tpu_custom_call.1} parent=51 // pred_region
          %406 = dma.done [#allocation10], 2048
        $region68: #{tpu_custom_call.1} parent=51 // pred_fallthru
          _
        // Predicated region
        $region69: #{tpu_custom_call.1} parent=51 // pred_check
          %p407 = pneg %p167
        $region70: #{tpu_custom_call.1} parent=51 // pred_check_branch
          %409 = sbr.rel (%p407) target = $region72
        $region71: #{tpu_custom_call.1} parent=51 // pred_region
          %410 = dma.done [#allocation10], 2048
        $region72: #{tpu_custom_call.1} parent=51 // pred_fallthru
          _
        // Predicated region
        $region73: #{tpu_custom_call.1} parent=51 // pred_check
          %p411 = pneg %p188
        $region74: #{tpu_custom_call.1} parent=51 // pred_check_branch
          %413 = sbr.rel (%p411) target = $region76
        $region75: #{tpu_custom_call.1} parent=51 // pred_region
          %414 = dma.done [#allocation13], 2048
        $region76: #{tpu_custom_call.1} parent=51 // pred_fallthru
          _
        %s415 = sand.u32 %s44, 1
        %s416 = scalar_lea.sflag [#allocation4], %s415
        %s417 = sand.u32 %s44, 1
        %s418 = smul.addr %s417, 8
        %s419 = scalar_lea.vmem [#allocation3], %s418
        %p420 = pneg %p57
        %p421 = pneg %p54
        %s422 = sand.u32 %s36, 1
        %s423 = scalar_lea.sflag [#allocation7], %s422
        %s424 = sand.u32 %s70, 1
        %s425 = smul.addr %s424, 8
        %s426 = scalar_lea.vmem [#allocation6], %s425
        %p427 = pneg %p83
        %p428 = pneg %p80
        %p429 = pneg %p104
        %p430 = pneg %p101
        %p431 = pneg %p125
        %p432 = pneg %p122
        %p433 = pneg %p146
        %p434 = pneg %p143
        %p435 = pneg %p167
        %p436 = pneg %p164
        %p437 = pneg %p188
        %p438 = pneg %p185
        %p439 = pneg %p209
        %p440 = pneg %p206
        %p441 = pneg %p235
        %p442 = pneg %p232
        %s443 = sand.u32 %s222, 1
        %s444 = scalar_lea.sflag [#allocation5], %s443
        %s445 = sand.u32 %s222, 1
        %s446 = smul.addr %s445, 8
        %s447 = scalar_lea.vmem [#allocation14], %s446
        %p448 = pneg %p261
        %p449 = pneg %p258
        %s450 = sand.u32 %s248, 1
        %s451 = scalar_lea.sflag [#allocation16], %s450
        %s452 = sand.u32 %s248, 1
        %s453 = smul.addr %s452, 8
        %s454 = scalar_lea.vmem [#allocation15], %s453
        %v455 = vld [vmem:[%s385] sm:$0xff]
        %v456 = vld [vmem:[%s394] sm:$0xff]
        %v457 = vld [vmem:[#allocation8] sm:$0xff]
        %v458 = vld [vmem:[#allocation8 + $0x8] sm:$0xff]
        %v459 = vld [vmem:[#allocation8 + $0x10] sm:$0xff]
        %v460 = vld [vmem:[#allocation8 + $0x18] sm:$0xff]
        %v461 = vld [vmem:[#allocation8 + $0x20] sm:$0xff]
        %v462 = vld [vmem:[#allocation8 + $0x28] sm:$0xff]
        %v463 = vld [vmem:[#allocation8 + $0x30] sm:$0xff]
        %v464 = vld [vmem:[#allocation8 + $0x38] sm:$0xff]
        %v465 = vld [vmem:[#allocation8 + $0x40] sm:$0xff]
        %v466 = vld [vmem:[#allocation8 + $0x48] sm:$0xff]
        %v467 = vld [vmem:[#allocation8 + $0x50] sm:$0xff]
        %v468 = vld [vmem:[#allocation8 + $0x58] sm:$0xff]
        %v469 = vld [vmem:[#allocation8 + $0x60] sm:$0xff]
        %v470 = vld [vmem:[#allocation8 + $0x68] sm:$0xff]
        %v471 = vld [vmem:[#allocation8 + $0x70] sm:$0xff]
        %v472 = vld [vmem:[#allocation8 + $0x78] sm:$0xff]
        %v473 = vld [vmem:[#allocation8 + $0x80] sm:$0xff]
        %v474 = vld [vmem:[#allocation8 + $0x88] sm:$0xff]
        %v475 = vld [vmem:[#allocation8 + $0x90] sm:$0xff]
        %v476 = vld [vmem:[#allocation8 + $0x98] sm:$0xff]
        %v477 = vld [vmem:[#allocation8 + $0xa0] sm:$0xff]
        %v478 = vld [vmem:[#allocation8 + $0xa8] sm:$0xff]
        %v479 = vld [vmem:[#allocation8 + $0xb0] sm:$0xff]
        %v480 = vld [vmem:[#allocation8 + $0xb8] sm:$0xff]
        %v481 = vld [vmem:[#allocation8 + $0xc0] sm:$0xff]
        %v482 = vld [vmem:[#allocation8 + $0xc8] sm:$0xff]
        %v483 = vld [vmem:[#allocation8 + $0xd0] sm:$0xff]
        %v484 = vld [vmem:[#allocation8 + $0xd8] sm:$0xff]
        %v485 = vld [vmem:[#allocation8 + $0xe0] sm:$0xff]
        %v486 = vld [vmem:[#allocation8 + $0xe8] sm:$0xff]
        %v487 = vld [vmem:[#allocation8 + $0xf0] sm:$0xff]
        %v488 = vld [vmem:[#allocation8 + $0xf8] sm:$0xff]
        %v489 = vld [vmem:[%s3] sm:$0x1]
        %v491 = vlaneseq
        %v492 = vshrl.u32 %v491, 7
        %v493 = vsub.s32 0, %v492
        %v494 = vrot.slane %v489, %v493
        %496 = vmatprep.subr.mxu0 0.0
        %497 = vmatpush1.msra.mxu0 %v457
        %498 = vmatprep.subr.mxu0 0.0
        %499 = vmatpush1.msra.mxu0 %v458
        %500 = vmatprep.subr.mxu0 0.0
        %501 = vmatpush1.msra.mxu0 %v459
        %502 = vmatprep.subr.mxu0 0.0
        %503 = vmatpush1.msra.mxu0 %v460
        %504 = vmatprep.subr.mxu0 0.0
        %505 = vmatpush1.msra.mxu0 %v461
        %506 = vmatprep.subr.mxu0 0.0
        %507 = vmatpush1.msra.mxu0 %v462
        %508 = vmatprep.subr.mxu0 0.0
        %509 = vmatpush1.msra.mxu0 %v463
        %510 = vmatprep.subr.mxu0 0.0
        %511 = vmatpush1.msra.mxu0 %v464
        %512 = vmatprep.subr.mxu0 0.0
        %513 = vmatpush1.msra.mxu0 %v465
        %514 = vmatprep.subr.mxu0 0.0
        %515 = vmatpush1.msra.mxu0 %v466
        %516 = vmatprep.subr.mxu0 0.0
        %517 = vmatpush1.msra.mxu0 %v467
        %518 = vmatprep.subr.mxu0 0.0
        %519 = vmatpush1.msra.mxu0 %v468
        %520 = vmatprep.subr.mxu0 0.0
        %521 = vmatpush1.msra.mxu0 %v469
        %522 = vmatprep.subr.mxu0 0.0
        %523 = vmatpush1.msra.mxu0 %v470
        %524 = vmatprep.subr.mxu0 0.0
        %525 = vmatpush1.msra.mxu0 %v471
        %526 = vmatprep.subr.mxu0 0.0
        %527 = vmatpush1.msra.mxu0 %v472
        %528 = vmatprep.subr.mxu0 0.0
        %529 = vmatpush1.msra.mxu0 %v473
        %530 = vmatprep.subr.mxu0 0.0
        %531 = vmatpush1.msra.mxu0 %v474
        %532 = vmatprep.subr.mxu0 0.0
        %533 = vmatpush1.msra.mxu0 %v475
        %534 = vmatprep.subr.mxu0 0.0
        %535 = vmatpush1.msra.mxu0 %v476
        %536 = vmatprep.subr.mxu0 0.0
        %537 = vmatpush1.msra.mxu0 %v477
        %538 = vmatprep.subr.mxu0 0.0
        %539 = vmatpush1.msra.mxu0 %v478
        %540 = vmatprep.subr.mxu0 0.0
        %541 = vmatpush1.msra.mxu0 %v479
        %542 = vmatprep.subr.mxu0 0.0
        %543 = vmatpush1.msra.mxu0 %v480
        %544 = vmatprep.subr.mxu0 0.0
        %545 = vmatpush1.msra.mxu0 %v481
        %546 = vmatprep.subr.mxu0 0.0
        %547 = vmatpush1.msra.mxu0 %v482
        %548 = vmatprep.subr.mxu0 0.0
        %549 = vmatpush1.msra.mxu0 %v483
        %550 = vmatprep.subr.mxu0 0.0
        %551 = vmatpush1.msra.mxu0 %v484
        %552 = vmatprep.subr.mxu0 0.0
        %553 = vmatpush1.msra.mxu0 %v485
        %554 = vmatprep.subr.mxu0 0.0
        %555 = vmatpush1.msra.mxu0 %v486
        %556 = vmatprep.subr.mxu0 0.0
        %557 = vmatpush1.msra.mxu0 %v487
        %558 = vmatprep.subr.mxu0 0.0
        %559 = vmatpush1.msra.mxu0 %v488
        %560 = vmatprep.mubr.f32.mxu0 %v456
        %561 = vmatmul.mubr.f32.gmra.mrb[0].mxu0 %v455
        %v562 = vpop.f32.mrb[0].mxu0
        %v563 = vadd.f32 %v494, %v562
        %v564 = vpop.f32.mrb[0].mxu0
        %565 = vdwg.mxu0
        %v566 = vld [vmem:[#allocation9] sm:$0xff]
        %v567 = vld [vmem:[#allocation9 + $0x8] sm:$0xff]
        %v568 = vld [vmem:[#allocation9 + $0x10] sm:$0xff]
        %v569 = vld [vmem:[#allocation9 + $0x18] sm:$0xff]
        %v570 = vld [vmem:[#allocation9 + $0x20] sm:$0xff]
        %v571 = vld [vmem:[#allocation9 + $0x28] sm:$0xff]
        %v572 = vld [vmem:[#allocation9 + $0x30] sm:$0xff]
        %v573 = vld [vmem:[#allocation9 + $0x38] sm:$0xff]
        %v574 = vld [vmem:[#allocation9 + $0x40] sm:$0xff]
        %v575 = vld [vmem:[#allocation9 + $0x48] sm:$0xff]
        %v576 = vld [vmem:[#allocation9 + $0x50] sm:$0xff]
        %v577 = vld [vmem:[#allocation9 + $0x58] sm:$0xff]
        %v578 = vld [vmem:[#allocation9 + $0x60] sm:$0xff]
        %v579 = vld [vmem:[#allocation9 + $0x68] sm:$0xff]
        %v580 = vld [vmem:[#allocation9 + $0x70] sm:$0xff]
        %v581 = vld [vmem:[#allocation9 + $0x78] sm:$0xff]
        %582 = vmatprep.subr.mxu0 0.0
        %583 = vmatpush1.msra.mxu0 %v566
        %584 = vmatprep.subr.mxu0 0.0
        %585 = vmatpush1.msra.mxu0 %v567
        %586 = vmatprep.subr.mxu0 0.0
        %587 = vmatpush1.msra.mxu0 %v568
        %588 = vmatprep.subr.mxu0 0.0
        %589 = vmatpush1.msra.mxu0 %v569
        %590 = vmatprep.subr.mxu0 0.0
        %591 = vmatpush1.msra.mxu0 %v570
        %592 = vmatprep.subr.mxu0 0.0
        %593 = vmatpush1.msra.mxu0 %v571
        %594 = vmatprep.subr.mxu0 0.0
        %595 = vmatpush1.msra.mxu0 %v572
        %596 = vmatprep.subr.mxu0 0.0
        %597 = vmatpush1.msra.mxu0 %v573
        %598 = vmatprep.subr.mxu0 0.0
        %599 = vmatpush1.msra.mxu0 %v574
        %600 = vmatprep.subr.mxu0 0.0
        %601 = vmatpush1.msra.mxu0 %v575
        %602 = vmatprep.subr.mxu0 0.0
        %603 = vmatpush1.msra.mxu0 %v576
        %604 = vmatprep.subr.mxu0 0.0
        %605 = vmatpush1.msra.mxu0 %v577
        %606 = vmatprep.subr.mxu0 0.0
        %607 = vmatpush1.msra.mxu0 %v578
        %608 = vmatprep.subr.mxu0 0.0
        %609 = vmatpush1.msra.mxu0 %v579
        %610 = vmatprep.subr.mxu0 0.0
        %611 = vmatpush1.msra.mxu0 %v580
        %612 = vmatprep.subr.mxu0 0.0
        %613 = vmatpush1.msra.mxu0 %v581
        %614 = vmatprep.subr.mxu0 0.0
        %615 = vmatpush1.msra.mxu0 0.0
        %616 = vmatprep.subr.mxu0 0.0
        %617 = vmatpush1.msra.mxu0 0.0
        %618 = vmatprep.subr.mxu0 0.0
        %619 = vmatpush1.msra.mxu0 0.0
        %620 = vmatprep.subr.mxu0 0.0
        %621 = vmatpush1.msra.mxu0 0.0
        %622 = vmatprep.subr.mxu0 0.0
        %623 = vmatpush1.msra.mxu0 0.0
        %624 = vmatprep.subr.mxu0 0.0
        %625 = vmatpush1.msra.mxu0 0.0
        %626 = vmatprep.subr.mxu0 0.0
        %627 = vmatpush1.msra.mxu0 0.0
        %628 = vmatprep.subr.mxu0 0.0
        %629 = vmatpush1.msra.mxu0 0.0
        %630 = vmatprep.subr.mxu0 0.0
        %631 = vmatpush1.msra.mxu0 0.0
        %632 = vmatprep.subr.mxu0 0.0
        %633 = vmatpush1.msra.mxu0 0.0
        %634 = vmatprep.subr.mxu0 0.0
        %635 = vmatpush1.msra.mxu0 0.0
        %636 = vmatprep.subr.mxu0 0.0
        %637 = vmatpush1.msra.mxu0 0.0
        %638 = vmatprep.subr.mxu0 0.0
        %639 = vmatpush1.msra.mxu0 0.0
        %640 = vmatprep.subr.mxu0 0.0
        %641 = vmatpush1.msra.mxu0 0.0
        %642 = vmatprep.subr.mxu0 0.0
        %643 = vmatpush1.msra.mxu0 0.0
        %644 = vmatprep.subr.mxu0 0.0
        %645 = vmatpush1.msra.mxu0 0.0
        %646 = vmatprep.mubr.f32.mxu0 0.0
        %647 = vmatmul.mubr.f32.gmra.mrb[0].mxu0 %v563
        %v648 = vpop.f32.mrb[0].mxu0
        %v649 = vadd.f32 0.0, %v648
        %v650 = vpop.f32.mrb[0].mxu0
        %651 = vdwg.mxu0
        %v652 = vmax.f32 %v649, 0.0
        %v653 = vld [vmem:[#allocation11] sm:$0xff]
        %v654 = vld [vmem:[#allocation11 + $0x8] sm:$0xff]
        %v655 = vld [vmem:[#allocation11 + $0x10] sm:$0xff]
        %v656 = vld [vmem:[#allocation11 + $0x18] sm:$0xff]
        %v657 = vld [vmem:[#allocation11 + $0x20] sm:$0xff]
        %v658 = vld [vmem:[#allocation11 + $0x28] sm:$0xff]
        %v659 = vld [vmem:[#allocation11 + $0x30] sm:$0xff]
        %v660 = vld [vmem:[#allocation11 + $0x38] sm:$0xff]
        %v661 = vld [vmem:[#allocation11 + $0x40] sm:$0xff]
        %v662 = vld [vmem:[#allocation11 + $0x48] sm:$0xff]
        %v663 = vld [vmem:[#allocation11 + $0x50] sm:$0xff]
        %v664 = vld [vmem:[#allocation11 + $0x58] sm:$0xff]
        %v665 = vld [vmem:[#allocation11 + $0x60] sm:$0xff]
        %v666 = vld [vmem:[#allocation11 + $0x68] sm:$0xff]
        %v667 = vld [vmem:[#allocation11 + $0x70] sm:$0xff]
        %v668 = vld [vmem:[#allocation11 + $0x78] sm:$0xff]
        %669 = vmatprep.subr.mxu0 0.0
        %670 = vmatpush1.msra.mxu0 %v653
        %671 = vmatprep.subr.mxu0 0.0
        %672 = vmatpush1.msra.mxu0 %v654
        %673 = vmatprep.subr.mxu0 0.0
        %674 = vmatpush1.msra.mxu0 %v655
        %675 = vmatprep.subr.mxu0 0.0
        %676 = vmatpush1.msra.mxu0 %v656
        %677 = vmatprep.subr.mxu0 0.0
        %678 = vmatpush1.msra.mxu0 %v657
        %679 = vmatprep.subr.mxu0 0.0
        %680 = vmatpush1.msra.mxu0 %v658
        %681 = vmatprep.subr.mxu0 0.0
        %682 = vmatpush1.msra.mxu0 %v659
        %683 = vmatprep.subr.mxu0 0.0
        %684 = vmatpush1.msra.mxu0 %v660
        %685 = vmatprep.subr.mxu0 0.0
        %686 = vmatpush1.msra.mxu0 %v661
        %687 = vmatprep.subr.mxu0 0.0
        %688 = vmatpush1.msra.mxu0 %v662
        %689 = vmatprep.subr.mxu0 0.0
        %690 = vmatpush1.msra.mxu0 %v663
        %691 = vmatprep.subr.mxu0 0.0
        %692 = vmatpush1.msra.mxu0 %v664
        %693 = vmatprep.subr.mxu0 0.0
        %694 = vmatpush1.msra.mxu0 %v665
        %695 = vmatprep.subr.mxu0 0.0
        %696 = vmatpush1.msra.mxu0 %v666
        %697 = vmatprep.subr.mxu0 0.0
        %698 = vmatpush1.msra.mxu0 %v667
        %699 = vmatprep.subr.mxu0 0.0
        %700 = vmatpush1.msra.mxu0 %v668
        %701 = vmatprep.subr.mxu0 0.0
        %702 = vmatpush1.msra.mxu0 0.0
        %703 = vmatprep.subr.mxu0 0.0
        %704 = vmatpush1.msra.mxu0 0.0
        %705 = vmatprep.subr.mxu0 0.0
        %706 = vmatpush1.msra.mxu0 0.0
        %707 = vmatprep.subr.mxu0 0.0
        %708 = vmatpush1.msra.mxu0 0.0
        %709 = vmatprep.subr.mxu0 0.0
        %710 = vmatpush1.msra.mxu0 0.0
        %711 = vmatprep.subr.mxu0 0.0
        %712 = vmatpush1.msra.mxu0 0.0
        %713 = vmatprep.subr.mxu0 0.0
        %714 = vmatpush1.msra.mxu0 0.0
        %715 = vmatprep.subr.mxu0 0.0
        %716 = vmatpush1.msra.mxu0 0.0
        %717 = vmatprep.subr.mxu0 0.0
        %718 = vmatpush1.msra.mxu0 0.0
        %719 = vmatprep.subr.mxu0 0.0
        %720 = vmatpush1.msra.mxu0 0.0
        %721 = vmatprep.subr.mxu0 0.0
        %722 = vmatpush1.msra.mxu0 0.0
        %723 = vmatprep.subr.mxu0 0.0
        %724 = vmatpush1.msra.mxu0 0.0
        %725 = vmatprep.subr.mxu0 0.0
        %726 = vmatpush1.msra.mxu0 0.0
        %727 = vmatprep.subr.mxu0 0.0
        %728 = vmatpush1.msra.mxu0 0.0
        %729 = vmatprep.subr.mxu0 0.0
        %730 = vmatpush1.msra.mxu0 0.0
        %731 = vmatprep.subr.mxu0 0.0
        %732 = vmatpush1.msra.mxu0 0.0
        %733 = vmatprep.mubr.f32.mxu0 0.0
        %734 = vmatmul.mubr.f32.gmra.mrb[0].mxu0 %v652
        %v735 = vpop.f32.mrb[0].mxu0
        %v736 = vadd.f32 0.0, %v735
        %v737 = vpop.f32.mrb[0].mxu0
        %738 = vdwg.mxu0
        %v739 = vxor.u32 %v736, 2147483648
        %v740 = vmul.f32 %v739, 1.442695
        %v741 = vpow.pop %v740
        %v742 = vadd.f32 %v741, 1.0
        %v743 = vrcp.pop %v742
        %v744 = vmul.f32 1.0, %v743
        %v745 = vmul.f32 %v563, %v744
        %746 = vst [vmem:[%s447] sm:$0xff] %v745
        %v747 = vld [vmem:[#allocation12] sm:$0xff]
        %v748 = vld [vmem:[#allocation12 + $0x8] sm:$0xff]
        %v749 = vld [vmem:[#allocation12 + $0x10] sm:$0xff]
        %v750 = vld [vmem:[#allocation12 + $0x18] sm:$0xff]
        %v751 = vld [vmem:[#allocation12 + $0x20] sm:$0xff]
        %v752 = vld [vmem:[#allocation12 + $0x28] sm:$0xff]
        %v753 = vld [vmem:[#allocation12 + $0x30] sm:$0xff]
        %v754 = vld [vmem:[#allocation12 + $0x38] sm:$0xff]
        %v755 = vld [vmem:[#allocation12 + $0x40] sm:$0xff]
        %v756 = vld [vmem:[#allocation12 + $0x48] sm:$0xff]
        %v757 = vld [vmem:[#allocation12 + $0x50] sm:$0xff]
        %v758 = vld [vmem:[#allocation12 + $0x58] sm:$0xff]
        %v759 = vld [vmem:[#allocation12 + $0x60] sm:$0xff]
        %v760 = vld [vmem:[#allocation12 + $0x68] sm:$0xff]
        %v761 = vld [vmem:[#allocation12 + $0x70] sm:$0xff]
        %v762 = vld [vmem:[#allocation12 + $0x78] sm:$0xff]
        %s763 = sld [smem:[#allocation2]]
        %v764 = vstv %s763
        %765 = vmatprep.subr.mxu0 0.0
        %766 = vmatpush1.msra.mxu0 %v747
        %767 = vmatprep.subr.mxu0 0.0
        %768 = vmatpush1.msra.mxu0 %v748
        %769 = vmatprep.subr.mxu0 0.0
        %770 = vmatpush1.msra.mxu0 %v749
        %771 = vmatprep.subr.mxu0 0.0
        %772 = vmatpush1.msra.mxu0 %v750
        %773 = vmatprep.subr.mxu0 0.0
        %774 = vmatpush1.msra.mxu0 %v751
        %775 = vmatprep.subr.mxu0 0.0
        %776 = vmatpush1.msra.mxu0 %v752
        %777 = vmatprep.subr.mxu0 0.0
        %778 = vmatpush1.msra.mxu0 %v753
        %779 = vmatprep.subr.mxu0 0.0
        %780 = vmatpush1.msra.mxu0 %v754
        %781 = vmatprep.subr.mxu0 0.0
        %782 = vmatpush1.msra.mxu0 %v755
        %783 = vmatprep.subr.mxu0 0.0
        %784 = vmatpush1.msra.mxu0 %v756
        %785 = vmatprep.subr.mxu0 0.0
        %786 = vmatpush1.msra.mxu0 %v757
        %787 = vmatprep.subr.mxu0 0.0
        %788 = vmatpush1.msra.mxu0 %v758
        %789 = vmatprep.subr.mxu0 0.0
        %790 = vmatpush1.msra.mxu0 %v759
        %791 = vmatprep.subr.mxu0 0.0
        %792 = vmatpush1.msra.mxu0 %v760
        %793 = vmatprep.subr.mxu0 0.0
        %794 = vmatpush1.msra.mxu0 %v761
        %795 = vmatprep.subr.mxu0 0.0
        %796 = vmatpush1.msra.mxu0 %v762
        %797 = vmatprep.subr.mxu0 0.0
        %798 = vmatpush1.msra.mxu0 0.0
        %799 = vmatprep.subr.mxu0 0.0
        %800 = vmatpush1.msra.mxu0 0.0
        %801 = vmatprep.subr.mxu0 0.0
        %802 = vmatpush1.msra.mxu0 0.0
        %803 = vmatprep.subr.mxu0 0.0
        %804 = vmatpush1.msra.mxu0 0.0
        %805 = vmatprep.subr.mxu0 0.0
        %806 = vmatpush1.msra.mxu0 0.0
        %807 = vmatprep.subr.mxu0 0.0
        %808 = vmatpush1.msra.mxu0 0.0
        %809 = vmatprep.subr.mxu0 0.0
        %810 = vmatpush1.msra.mxu0 0.0
        %811 = vmatprep.subr.mxu0 0.0
        %812 = vmatpush1.msra.mxu0 0.0
        %813 = vmatprep.subr.mxu0 0.0
        %814 = vmatpush1.msra.mxu0 0.0
        %815 = vmatprep.subr.mxu0 0.0
        %816 = vmatpush1.msra.mxu0 0.0
        %817 = vmatprep.subr.mxu0 0.0
        %818 = vmatpush1.msra.mxu0 0.0
        %819 = vmatprep.subr.mxu0 0.0
        %820 = vmatpush1.msra.mxu0 0.0
        %821 = vmatprep.subr.mxu0 0.0
        %822 = vmatpush1.msra.mxu0 0.0
        %823 = vmatprep.subr.mxu0 0.0
        %824 = vmatpush1.msra.mxu0 0.0
        %825 = vmatprep.subr.mxu0 0.0
        %826 = vmatpush1.msra.mxu0 0.0
        %827 = vmatprep.subr.mxu0 0.0
        %828 = vmatpush1.msra.mxu0 0.0
        %829 = vmatprep.mubr.f32.mxu0 0.0
        %830 = vmatmul.mubr.f32.gmra.mrb[0].mxu0 %v563
        %v831 = vpop.f32.mrb[0].mxu0
        %v832 = vadd.f32 %v764, %v831
        %v833 = vpop.f32.mrb[0].mxu0
        %834 = vdwg.mxu0
        %v835 = vmul.f32 %v563, %v832
        %836 = vst [vmem:[%s454] sm:$0xff] %v835
        %s837 = sand.u32 %s222, 1
        %s838 = scalar_lea.sflag [#allocation5], %s837
        %s839 = sand.u32 %s222, 1
        %s840 = smul.addr %s839, 8
        %s841 = scalar_lea.vmem [#allocation14], %s840
        %s842 = sand.u32 %s248, 1
        %s843 = scalar_lea.sflag [#allocation16], %s842
        %s844 = sand.u32 %s248, 1
        %s845 = smul.addr %s844, 8
        %s846 = scalar_lea.vmem [#allocation15], %s845
        // Predicated region
        $region77: #{tpu_custom_call.1} parent=51 // pred_check
          %p847 = pneg %p232
        $region78: #{tpu_custom_call.1} parent=51 // pred_check_branch
          %849 = sbr.rel (%p847) target = $region80
        $region79: #{tpu_custom_call.1} parent=51 // pred_region
          %s851 = ssub.s32 128, 128
          %852 = vsyncadd %s838, %s851
          %s853 = smul.addr %s36, 128
          %s854 = scalar_lea.hbm %s8, %s853
          %s856 = sshll.u32 %s841, 4
          %s857 = int_to_ptr.vmem [resolvable:$true] %s856
          %859 = dma.vmem_to_hbm [thread:$0]  %s857, 128, %s854, %s838
        $region80: #{tpu_custom_call.1} parent=51 // pred_fallthru
          _
        // Predicated region
        $region81: #{tpu_custom_call.1} parent=51 // pred_check
          %p860 = pneg %p258
        $region82: #{tpu_custom_call.1} parent=51 // pred_check_branch
          %862 = sbr.rel (%p860) target = $region84
        $region83: #{tpu_custom_call.1} parent=51 // pred_region
          %s864 = ssub.s32 128, 128
          %865 = vsyncadd %s843, %s864
          %s866 = smul.addr %s36, 128
          %s867 = scalar_lea.hbm %s9, %s866
          %s869 = sshll.u32 %s846, 4
          %s870 = int_to_ptr.vmem [resolvable:$true] %s869
          %872 = dma.vmem_to_hbm [thread:$0]  %s870, 128, %s867, %s843
        $region84: #{tpu_custom_call.1} parent=51 // pred_fallthru
          _
      $region52: #{tpu_custom_call.1} parent=5 // pred_fallthru
        _
      %p873 = scmp.le.s32.totalorder 2, %s31
      // Predicated region
      $region85: #{tpu_custom_call.1} parent=5 // pred_check
        %p874 = pneg %p873
      $region86: #{tpu_custom_call.1} parent=5 // pred_check_branch
        %876 = sbr.rel (%p874) target = $region88
      $region87: #{tpu_custom_call.1} parent=5 // pred_region
        %s877 = ssub.s32 %s31, 2
        // Predicated region
        $region89: #{tpu_custom_call.1} parent=87 // pred_check
          %p878 = pneg %p238
        $region90: #{tpu_custom_call.1} parent=87 // pred_check_branch
          %880 = sbr.rel (%p878) target = $region92
        $region91: #{tpu_custom_call.1} parent=87 // pred_region
          %s881 = sand.u32 %s223, 1
          %s882 = scalar_lea.sflag [#allocation5], %s881
          %s883 = sand.u32 %s223, 1
          %s884 = smul.addr %s883, 8
          %s885 = scalar_lea.vmem [#allocation14], %s884
          %886 = dma.done %s882, 128
        $region92: #{tpu_custom_call.1} parent=87 // pred_fallthru
          _
        // Predicated region
        $region93: #{tpu_custom_call.1} parent=87 // pred_check
          %p887 = pneg %p264
        $region94: #{tpu_custom_call.1} parent=87 // pred_check_branch
          %889 = sbr.rel (%p887) target = $region96
        $region95: #{tpu_custom_call.1} parent=87 // pred_region
          %s890 = sand.u32 %s249, 1
          %s891 = scalar_lea.sflag [#allocation16], %s890
          %s892 = sand.u32 %s249, 1
          %s893 = smul.addr %s892, 8
          %s894 = scalar_lea.vmem [#allocation15], %s893
          %895 = dma.done %s891, 128
        $region96: #{tpu_custom_call.1} parent=87 // pred_fallthru
          _
      $region88: #{tpu_custom_call.1} parent=5 // pred_fallthru
        _
    $region6: #{tpu_custom_call.1} parent=1 // loop_footer
      %s35 = sadd.s32 1, %s31
    $region7: #{tpu_custom_call.1} parent=1 // loop_footer_branch
      %30 = sbr.rel target = $region3
    $region8: #{tpu_custom_call.1} parent=1 // loop_exit
      _
    %896 = vsyncpa [#allocation4], 1
    %s897 = scalar_lea.sflag [#allocation4], 1
    %898 = vsyncpa %s897, 1
    %899 = vsyncpa [#allocation7], 1
    %s900 = scalar_lea.sflag [#allocation7], 1
    %901 = vsyncpa %s900, 1
    %902 = vsyncpa [#allocation10], 1
    %903 = vsyncpa [#allocation13], 1
    %904 = vsyncpa [#allocation5], 1
    %s905 = scalar_lea.sflag [#allocation5], 1
    %906 = vsyncpa %s905, 1
    %907 = vsyncpa [#allocation16], 1
    %s908 = scalar_lea.sflag [#allocation16], 1
    %909 = vsyncpa %s908, 1

</llo_original>
